<compile_context>
chip_gen: v7x
topology: tpu7x:2x2x1
jax: 0.10.0
libtpu: 0.0.40
codegen_flags: <defaults>
</compile_context>

<pallas_src>
import math
import numpy as np

import jax
import jax.numpy as jnp
from jax.experimental import pallas as pl
from jax.experimental.pallas import tpu as pltpu


# ----------------------------------------------------------------------------
# Deterministic parameter / buffer construction (mirrors the module __init__)
# ----------------------------------------------------------------------------
def gaussian_kernel_2d(filter_size: int, std: float) -> np.ndarray:
    ax = np.arange(filter_size, dtype=np.float32)
    mean = (filter_size - 1) / 2.0
    g = (1.0 / (std * math.sqrt(2.0 * math.pi))) * np.exp(-((ax - mean) / std) ** 2 / 2.0)
    k = np.outer(g, g)
    k = k / k.sum()
    return k.astype(np.float32)


def make_base_flow(im_size: int) -> np.ndarray:
    lin = np.linspace(-1.0, 1.0, im_size, dtype=np.float32)
    xflow, yflow = np.meshgrid(lin, lin)          # 'xy' indexing
    return np.stack([xflow, yflow], axis=0)       # (2, H, W): [0]=x, [1]=y


# ----------------------------------------------------------------------------
# Pallas kernel: separable bilinear grid_sample for a block of NB batch items
# ----------------------------------------------------------------------------
def make_warp_kernel(C, H, W, Hin, Win, NB):
    P = H * W            # output pixels
    sx = 0.5 * float(Win)
    sy = 0.5 * float(Hin)

    def kernel(im_ref, flow_ref, base_ref, out_ref):
        # im_ref:   (NB, C*Hin, Win)  image rows stacked for the column matmul
        # flow_ref: (NB, 2, P)        smoothed flow, channel 0 = x, 1 = y
        # base_ref: (2, P)            identity grid already in pixel coordinates
        # out_ref:  (NB, C, P)        warped images (lane-dense)

        # --- batched pixel-space sample coordinates (one FMA per pixel/axis) ---
        flow = flow_ref[...]                                    # (NB, 2, P)
        ix = flow[:, 0, :] * sx + base_ref[0:1, :]              # (NB, P)
        iy = flow[:, 1, :] * sy + base_ref[1:2, :]              # (NB, P)

        # batch-invariant float iotas (hoisted; built once per grid step)
        c_iota = jax.lax.broadcasted_iota(
            jnp.int32, (1, Win, 1), 1).astype(jnp.float32)      # (1, Win, 1)
        r_iota = jax.lax.broadcasted_iota(
            jnp.int32, (1, Hin, 1), 1).astype(jnp.float32)      # (1, Hin, 1)

        # --- hat-function bilinear selectors --------------------------------
        # max(0, 1 - |iota - coord|) is exactly the two-tap (floor / floor+1)
        # one-hot weight sum, and out-of-range taps contribute exactly zero
        # (grid_sample padding_mode='zeros') because |iota - coord| >= 1 there.
        csel = jnp.maximum(0.0, 1.0 - jnp.abs(c_iota - ix[:, None, :]))  # (NB, Win, P)
        rsel = jnp.maximum(0.0, 1.0 - jnp.abs(r_iota - iy[:, None, :]))  # (NB, Hin, P)

        # --- column contraction on the MXU ----------------------------------
        # (NB, C*Hin, Win) x (NB, Win, P) -> (NB, C*Hin, P)
        # Default precision passes the 1e-4 test at these magnitudes; switch to
        # precision=HIGHEST consciously if magnitudes / tolerances change.
        tmp = jnp.einsum('bmx,bxp->bmp', im_ref[...], csel,
                         preferred_element_type=jnp.float32)    # (NB, C*Hin, P)
        tmp = tmp.reshape(NB, C, Hin, P)

        # --- row-weighted reduction over Hin (VPU multiply + XLU reduce) ----
        out = jnp.sum(tmp * rsel[:, None, :, :], axis=2)        # (NB, C, P)
        out_ref[...] = out.astype(out_ref.dtype)

    return kernel


def _pick_batch_block(N, batch_block):
    # Divide N exactly (no wasted padded work) and keep grid length >= 2 so
    # both v7x TensorCores get work and the input/output DMAs double-buffer.
    cap = max(1, min(batch_block, N // 2 if N >= 2 else 1))
    for nb in range(cap, 0, -1):
        if N % nb == 0:
            return nb
    return 1


# ----------------------------------------------------------------------------
# Wrapper: pad + Gaussian smoothing in XLA, warp in Pallas
# ----------------------------------------------------------------------------
def elastic_forward(im, params, gauss_np, base_np, filter_size, batch_block=4):
    N, C, Hin, Win = im.shape
    H, W = params.shape[2], params.shape[3]
    P = H * W
    pad = (filter_size - 1) // 2

    # reflect pad + depthwise Gaussian smoothing (2 channels, fs x fs) — hoisted
    # out of the kernel: XLA handles this trivially, the kernel keeps only the
    # grid math + matmul.
    flow_pad = jnp.pad(params, ((0, 0), (0, 0), (pad, pad), (pad, pad)),
                       mode='reflect')
    weight = jnp.broadcast_to(
        jnp.asarray(gauss_np, jnp.float32)[None, None],
        (2, 1, filter_size, filter_size))
    local_flow = jax.lax.conv_general_dilated(
        flow_pad, weight, (1, 1), 'VALID',
        dimension_numbers=('NCHW', 'OIHW', 'NCHW'),
        feature_group_count=2)                                   # (N, 2, H, W)

    # layouts for the kernel
    im_rows = im.reshape(N, C * Hin, Win)      # LHS of the column matmul
    flow_flat = local_flow.reshape(N, 2, P)    # lane-dense (last dim = H*W)

    # fold grid normalization into the base flow: base_px = ((base+1)*size - 1)/2
    base_np = np.asarray(base_np, np.float32)
    base_px = np.stack(
        [((base_np[0] + 1.0) * Win - 1.0) * 0.5,
         ((base_np[1] + 1.0) * Hin - 1.0) * 0.5], axis=0
    ).reshape(2, P).astype(np.float32)
    base_px = jnp.asarray(base_px)

    NB = _pick_batch_block(N, batch_block)

    kernel = make_warp_kernel(C, H, W, Hin, Win, NB)
    out_flat = pl.pallas_call(
        kernel,
        out_shape=jax.ShapeDtypeStruct((N, C, P), im.dtype),
        grid_spec=pltpu.PrefetchScalarGridSpec(
            num_scalar_prefetch=0,
            grid=(N // NB,),
            in_specs=[
                pl.BlockSpec((NB, C * Hin, Win), lambda b: (b, 0, 0)),
                pl.BlockSpec((NB, 2, P), lambda b: (b, 0, 0)),
                pl.BlockSpec((2, P), lambda b: (0, 0)),
            ],
            out_specs=pl.BlockSpec((NB, C, P), lambda b: (b, 0, 0)),
        ),
        compiler_params=pltpu.CompilerParams(
            dimension_semantics=("parallel",)),   # batch items independent (2 TCs on v7x)
    )(im_rows, flow_flat, base_px)

    return out_flat.reshape(N, C, H, W)


# ----------------------------------------------------------------------------
# Pure-JAX reference (independent gather-based grid_sample) for correctness
# ----------------------------------------------------------------------------
def grid_sample_ref(im, grid):
    N, C, Hin, Win = im.shape
    ix = ((grid[..., 0] + 1.0) * Win - 1.0) / 2.0
    iy = ((grid[..., 1] + 1.0) * Hin - 1.0) / 2.0
    x0 = jnp.floor(ix).astype(jnp.int32)
    y0 = jnp.floor(iy).astype(jnp.int32)
    x1 = x0 + 1
    y1 = y0 + 1
    wx1 = ix - x0.astype(ix.dtype)
    wx0 = 1.0 - wx1
    wy1 = iy - y0.astype(iy.dtype)
    wy0 = 1.0 - wy1

    def gather(xi, yi):
        valid = ((xi >= 0) & (xi < Win) & (yi >= 0) & (yi < Hin)).astype(im.dtype)
        xc = jnp.clip(xi, 0, Win - 1)
        yc = jnp.clip(yi, 0, Hin - 1)

        def one(im_n, yc_n, xc_n, v_n):
            return im_n[:, yc_n, xc_n] * v_n[None]

        return jax.vmap(one)(im, yc, xc, valid)

    out = (gather(x0, y0) * (wy0 * wx0)[:, None]
           + gather(x1, y0) * (wy0 * wx1)[:, None]
           + gather(x0, y1) * (wy1 * wx0)[:, None]
           + gather(x1, y1) * (wy1 * wx1)[:, None])
    return out


def reference_forward(im, params, gauss_np, base_np, filter_size):
    p = (filter_size - 1) // 2
    flow_pad = jnp.pad(params, ((0, 0), (0, 0), (p, p), (p, p)), mode='reflect')
    weight = jnp.broadcast_to(
        jnp.asarray(gauss_np, jnp.float32)[None, None],
        (2, 1, filter_size, filter_size))
    local = jax.lax.conv_general_dilated(
        flow_pad, weight, (1, 1), 'VALID',
        dimension_numbers=('NCHW', 'OIHW', 'NCHW'),
        feature_group_count=2)
    base_hw2 = jnp.transpose(jnp.asarray(base_np, jnp.float32), (1, 2, 0))
    grid = jnp.transpose(local, (0, 2, 3, 1)) + base_hw2[None]
    return grid_sample_ref(im, grid)


if __name__ == "__main__":
    im_size = 16
    filter_size = 5
    std = 1.0
    N, C = 2, 4

    key = jax.random.PRNGKey(0)
    k1, k2 = jax.random.split(key)
    im = jax.random.normal(k1, (N, C, im_size, im_size), dtype=jnp.float32)
    params = 0.1 * jax.random.normal(k2, (N, 2, im_size, im_size), dtype=jnp.float32)

    gauss_np = gaussian_kernel_2d(filter_size, std)
    base_np = make_base_flow(im_size)

    out = elastic_forward(im, params, gauss_np, base_np, filter_size)
    out = jax.block_until_ready(out)

    ref = reference_forward(im, params, gauss_np, base_np, filter_size)
    np.testing.assert_allclose(np.asarray(out), np.asarray(ref), rtol=1e-4, atol=1e-4)

    print("KERNEL_OK")
</pallas_src>

<mosaic_0001>
module attributes {stable_mosaic.version = 11 : i64} {
  func.func @kernel(%arg0: i32, %arg1: memref<1x64x16xf32, #tpu.memory_space<vmem>>, %arg2: memref<1x2x256xf32, #tpu.memory_space<vmem>>, %arg3: memref<2x256xf32, #tpu.memory_space<vmem>>, %arg4: memref<1x4x256xf32, #tpu.memory_space<vmem>>) attributes {dimension_semantics = [#tpu.dimension_semantics<parallel>], iteration_bounds = array<i64: 2>, scalar_prefetch = 0 : i64, scratch_operands = 0 : i64, tpu.core_type = #tpu.core_type<tc>, window_params = [{transform_indices = @transform_0, window_bounds = array<i64: 1, 64, 16>}, {transform_indices = @transform_1, window_bounds = array<i64: 1, 2, 256>}, {pipeline_mode = #tpu.pipeline_mode<synchronous>, transform_indices = @transform_2, window_bounds = array<i64: 2, 256>}, {transform_indices = @transform_3, window_bounds = array<i64: 1, 4, 256>}]} {
    %c0 = arith.constant 0 : index
    %c0_0 = arith.constant 0 : index
    %c0_1 = arith.constant 0 : index
    %0 = vector.load %arg2[%c0, %c0_0, %c0_1] : memref<1x2x256xf32, #tpu.memory_space<vmem>>, vector<1x2x256xf32>
    %1 = vector.extract_strided_slice %0 {offsets = [0, 0, 0], sizes = [1, 1, 256], strides = [1, 1, 1]} : vector<1x2x256xf32> to vector<1x1x256xf32>
    %2 = vector.shape_cast %1 : vector<1x1x256xf32> to vector<1x256xf32>
    %cst = arith.constant 8.000000e+00 : f32
    %3 = vector.broadcast %cst : f32 to vector<1x256xf32>
    %4 = arith.mulf %2, %3 : vector<1x256xf32>
    %c0_2 = arith.constant 0 : index
    %c0_3 = arith.constant 0 : index
    %5 = vector.load %arg3[%c0_2, %c0_3] : memref<2x256xf32, #tpu.memory_space<vmem>>, vector<1x256xf32>
    %6 = arith.addf %4, %5 : vector<1x256xf32>
    %7 = vector.extract_strided_slice %0 {offsets = [0, 1, 0], sizes = [1, 1, 256], strides = [1, 1, 1]} : vector<1x2x256xf32> to vector<1x1x256xf32>
    %8 = vector.shape_cast %7 : vector<1x1x256xf32> to vector<1x256xf32>
    %cst_4 = arith.constant 8.000000e+00 : f32
    %9 = vector.broadcast %cst_4 : f32 to vector<1x256xf32>
    %10 = arith.mulf %8, %9 : vector<1x256xf32>
    %c1 = arith.constant 1 : index
    %c0_5 = arith.constant 0 : index
    %11 = vector.load %arg3[%c1, %c0_5] : memref<2x256xf32, #tpu.memory_space<vmem>>, vector<1x256xf32>
    %12 = arith.addf %10, %11 : vector<1x256xf32>
    %13 = tpu.iota {dimensions = array<i32: 1>} : vector<1x16x1xi32>
    %14 = arith.sitofp %13 : vector<1x16x1xi32> to vector<1x16x1xf32>
    %15 = tpu.iota {dimensions = array<i32: 1>} : vector<1x16x1xi32>
    %16 = arith.sitofp %15 : vector<1x16x1xi32> to vector<1x16x1xf32>
    %17 = vector.shape_cast %6 : vector<1x256xf32> to vector<1x1x256xf32>
    %18 = vector.broadcast %14 : vector<1x16x1xf32> to vector<1x16x256xf32>
    %19 = vector.broadcast %17 : vector<1x1x256xf32> to vector<1x16x256xf32>
    %20 = arith.subf %18, %19 : vector<1x16x256xf32>
    %21 = math.absf %20 : vector<1x16x256xf32>
    %cst_6 = arith.constant 1.000000e+00 : f32
    %22 = vector.broadcast %cst_6 : f32 to vector<1x16x256xf32>
    %23 = arith.subf %22, %21 : vector<1x16x256xf32>
    %cst_7 = arith.constant 0.000000e+00 : f32
    %24 = vector.broadcast %cst_7 : f32 to vector<1x16x256xf32>
    %25 = arith.maximumf %24, %23 : vector<1x16x256xf32>
    %26 = vector.shape_cast %12 : vector<1x256xf32> to vector<1x1x256xf32>
    %27 = vector.broadcast %16 : vector<1x16x1xf32> to vector<1x16x256xf32>
    %28 = vector.broadcast %26 : vector<1x1x256xf32> to vector<1x16x256xf32>
    %29 = arith.subf %27, %28 : vector<1x16x256xf32>
    %30 = math.absf %29 : vector<1x16x256xf32>
    %cst_8 = arith.constant 1.000000e+00 : f32
    %31 = vector.broadcast %cst_8 : f32 to vector<1x16x256xf32>
    %32 = arith.subf %31, %30 : vector<1x16x256xf32>
    %cst_9 = arith.constant 0.000000e+00 : f32
    %33 = vector.broadcast %cst_9 : f32 to vector<1x16x256xf32>
    %34 = arith.maximumf %33, %32 : vector<1x16x256xf32>
    %c0_10 = arith.constant 0 : index
    %c0_11 = arith.constant 0 : index
    %c0_12 = arith.constant 0 : index
    %35 = vector.load %arg1[%c0_10, %c0_11, %c0_12] : memref<1x64x16xf32, #tpu.memory_space<vmem>>, vector<1x64x16xf32>
    "tpu.trace_start"() <{level = 10 : i32, message = "bmx,bxp->bmp"}> : () -> ()
    %cst_13 = arith.constant dense<0.000000e+00> : vector<1x64x256xf32>
    %36 = tpu.matmul %35, %25, %cst_13 {dimension_numbers = #tpu.dot_dimension_numbers<[2], [1], [1], [2], [0, 0, 0, 1, 1, 2], [0], [0]>} : vector<1x64x16xf32>, vector<1x16x256xf32>, vector<1x64x256xf32> -> vector<1x64x256xf32>
    "tpu.trace_stop"() : () -> ()
    %37 = vector.shape_cast %36 : vector<1x64x256xf32> to vector<1x4x16x256xf32>
    %38 = vector.shape_cast %34 : vector<1x16x256xf32> to vector<1x1x16x256xf32>
    %39 = vector.broadcast %38 : vector<1x1x16x256xf32> to vector<1x4x16x256xf32>
    %40 = arith.mulf %37, %39 : vector<1x4x16x256xf32>
    %cst_14 = arith.constant dense<0.000000e+00> : vector<1x4x256xf32>
    %41 = vector.multi_reduction <add>, %40, %cst_14 [2] : vector<1x4x16x256xf32> to vector<1x4x256xf32>
    %c0_15 = arith.constant 0 : index
    %c0_16 = arith.constant 0 : index
    %c0_17 = arith.constant 0 : index
    %42 = vector.load %arg4[%c0_15, %c0_16, %c0_17] : memref<1x4x256xf32, #tpu.memory_space<vmem>>, vector<1x4x256xf32>
    tpu.vector_store %arg4[%c0_15, %c0_16, %c0_17], %41 {strides = array<i32>} : memref<1x4x256xf32, #tpu.memory_space<vmem>>, vector<1x4x256xf32>,
    return
  }
  func.func @transform_0(%arg0: i32) -> (i32, i32, i32) {
    %c0_i32 = arith.constant 0 : i32
    %c0_i32_0 = arith.constant 0 : i32
    %c0_i32_1 = arith.constant 0 : i32
    return %arg0, %c0_i32, %c0_i32_0 : i32, i32, i32
  }
  func.func @transform_1(%arg0: i32) -> (i32, i32, i32) {
    %c0_i32 = arith.constant 0 : i32
    %c0_i32_0 = arith.constant 0 : i32
    %c0_i32_1 = arith.constant 0 : i32
    return %arg0, %c0_i32, %c0_i32_0 : i32, i32, i32
  }
  func.func @transform_2(%arg0: i32) -> (i32, i32) {
    %c0_i32 = arith.constant 0 : i32
    %c0_i32_0 = arith.constant 0 : i32
    %c0_i32_1 = arith.constant 0 : i32
    return %c0_i32, %c0_i32_0 : i32, i32
  }
  func.func @transform_3(%arg0: i32) -> (i32, i32, i32) {
    %c0_i32 = arith.constant 0 : i32
    %c0_i32_0 = arith.constant 0 : i32
    %c0_i32_1 = arith.constant 0 : i32
    return %arg0, %c0_i32, %c0_i32_0 : i32, i32, i32
  }
}

</mosaic_0001>

<llo_original>
// kernel: tpu_custom_call.1
$region0: #{tpu_custom_call.1}
  #allocation0 [shape = 'u32[]', space=smem, size = 0x4, offset = 0x4, fixed_abs, tag = 'smem constant byte address 0x4 - core index']
  #allocation1 [shape = 'u32[144,128]{1,0:T(1,128)}', space=vmem, size = 0x12000, scoped, tag = 'internal scratch']
  %s0 = inlined_call_operand.vmem [shape: f32[2,64,16], index: 0, kind: input, shape index: {}]
  %s1 = inlined_call_operand.vmem [shape: f32[2,2,256], index: 1, kind: input, shape index: {}]
  %s2 = inlined_call_operand.vmem [shape: f32[2,256], index: 2, kind: input, shape index: {}]
  %s3 = inlined_call_operand.hbm [shape: f32[2,4,256], index: 3, kind: output, shape index: {}]
  %s4 = sld [smem:[#allocation0]]
  $region45: #{tpu_custom_call.1} parent=0
    _
  %s6 = ssub.s32 1, %s4
  %s7 = scalar_select 0, %s6, %s4
  $region1: #{tpu_custom_call.1} parent=0
    #allocation2 [shape = 'u8[8192]{0}', space=vmem, size = 0x2000, scoped, tag = 'output window, operand 0']
    #allocation3 [shape = 's32[2]{0}', space=sflag, size = 0x8, scoped, tag = 'scoped memory for tpu_custom_call.1']
    %8 = vsyncpa [#allocation3], 0
    %s9 = scalar_lea.sflag [#allocation3], 1
    %10 = vsyncpa %s9, 0
    loop: start=0, step=1, limit=4
    $region2: #{tpu_custom_call.1} parent=1 // loop_pre_header
      _
    $region3: #{tpu_custom_call.1} parent=1 // loop_header
      %s12 = sphi 0, %s16
      %p13 = scmp.ge.s32.totalorder %s12, 4
      %s22 = sphi 0, %s24
      %s25 = sphi 0, %s22
      %s26 = sphi 0, %s25
      %s42 = sphi 0, %s26
      %s48 = sphi 0, %s50
      %s51 = sphi 0, %s48
      %s52 = sphi 0, %s51
      %s68 = sphi 0, %s52
      %s72 = sphi 0, %s72
      %s74 = sphi 0, %s72
      %s75 = sphi 0, %s74
      %s89 = sphi 0, %s75
      %s95 = sphi 0, %s97
      %s98 = sphi 0, %s95
      %s99 = sphi 0, %s98
      %s115 = sphi 0, %s99
    $region4: #{tpu_custom_call.1} parent=1 // loop_header_branch
      %15 = sbr.rel (%p13) target = $region8
    $region5: #{tpu_custom_call.1} parent=1 // loop_body
      %s17 = ssub.s32 %s12, 1
      %s18 = ssub.s32 %s12, 2
      %s19 = sadd.s32 %s12, 1
      %s20 = ssub.s32 %s12, %s19
      %p21 = scmp.eq.s32.totalorder %s20, 0
      %s23 = sadd.s32 %s22, 1
      %s24 = scalar_select %p21, %s22, %s23
      %p27 = pneg %p21
      %p28 = scmp.eq.s32.totalorder %s12, 1
      %p29 = por %p27, %p28
      %p30 = scmp.ne.s32.totalorder %s22, %s25
      %p31 = scmp.eq.s32.totalorder %s12, 0
      %p32 = por %p30, %p31
      %p33 = scmp.ne.s32.totalorder %s22, %s25
      %p34 = scmp.eq.s32.totalorder %s17, 1
      %p35 = por %p33, %p34
      %p36 = scmp.ne.s32.totalorder %s25, %s26
      %p37 = scmp.eq.s32.totalorder %s17, 0
      %p38 = por %p36, %p37
      %p39 = scmp.ne.s32.totalorder %s25, %s26
      %p40 = scmp.eq.s32.totalorder %s18, 1
      %p41 = por %p39, %p40
      %p43 = scmp.ne.s32.totalorder %s26, %s42
      %p44 = scmp.eq.s32.totalorder %s18, 0
      %p45 = por %p43, %p44
      %s46 = ssub.s32 %s12, %s19
      %p47 = scmp.eq.s32.totalorder %s46, 0
      %s49 = sadd.s32 %s48, 1
      %s50 = scalar_select %p47, %s48, %s49
      %p53 = pneg %p47
      %p54 = scmp.eq.s32.totalorder %s12, 1
      %p55 = por %p53, %p54
      %p56 = scmp.ne.s32.totalorder %s48, %s51
      %p57 = scmp.eq.s32.totalorder %s12, 0
      %p58 = por %p56, %p57
      %p59 = scmp.ne.s32.totalorder %s48, %s51
      %p60 = scmp.eq.s32.totalorder %s17, 1
      %p61 = por %p59, %p60
      %p62 = scmp.ne.s32.totalorder %s51, %s52
      %p63 = scmp.eq.s32.totalorder %s17, 0
      %p64 = por %p62, %p63
      %p65 = scmp.ne.s32.totalorder %s51, %s52
      %p66 = scmp.eq.s32.totalorder %s18, 1
      %p67 = por %p65, %p66
      %p69 = scmp.ne.s32.totalorder %s52, %s68
      %p70 = scmp.eq.s32.totalorder %s18, 0
      %p71 = por %p69, %p70
      %s73 = sadd.s32 %s72, 1
      %p76 = scmp.eq.s32.totalorder %s12, 1
      %p77 = scmp.ne.s32.totalorder %s72, %s74
      %p78 = scmp.eq.s32.totalorder %s12, 0
      %p79 = por %p77, %p78
      %p80 = scmp.ne.s32.totalorder %s72, %s74
      %p81 = scmp.eq.s32.totalorder %s17, 1
      %p82 = por %p80, %p81
      %p83 = scmp.ne.s32.totalorder %s74, %s75
      %p84 = scmp.eq.s32.totalorder %s17, 0
      %p85 = por %p83, %p84
      %p86 = scmp.ne.s32.totalorder %s74, %s75
      %p87 = scmp.eq.s32.totalorder %s18, 1
      %p88 = por %p86, %p87
      %p90 = scmp.ne.s32.totalorder %s75, %s89
      %p91 = scmp.eq.s32.totalorder %s18, 0
      %p92 = por %p90, %p91
      %s93 = ssub.s32 %s12, %s19
      %p94 = scmp.eq.s32.totalorder %s93, 0
      %s96 = sadd.s32 %s95, 1
      %s97 = scalar_select %p94, %s95, %s96
      %p100 = pneg %p94
      %p101 = scmp.eq.s32.totalorder %s12, 1
      %p102 = por %p100, %p101
      %p103 = scmp.ne.s32.totalorder %s95, %s98
      %p104 = scmp.eq.s32.totalorder %s12, 0
      %p105 = por %p103, %p104
      %p106 = scmp.ne.s32.totalorder %s95, %s98
      %p107 = scmp.eq.s32.totalorder %s17, 1
      %p108 = por %p106, %p107
      %p109 = scmp.ne.s32.totalorder %s98, %s99
      %p110 = scmp.eq.s32.totalorder %s17, 0
      %p111 = por %p109, %p110
      %p112 = scmp.ne.s32.totalorder %s98, %s99
      %p113 = scmp.eq.s32.totalorder %s18, 1
      %p114 = por %p112, %p113
      %p116 = scmp.ne.s32.totalorder %s99, %s115
      %p117 = scmp.eq.s32.totalorder %s18, 0
      %p118 = por %p116, %p117
      %p119 = scmp.le.s32.totalorder 1, %s12
      %p120 = scmp.lt.s32.totalorder %s12, 3
      %p121 = pnand %p119, %p120
      %p122 = pneg %p121
      // Predicated region
      $region9: #{tpu_custom_call.1} parent=5 // pred_check
        _
      $region10: #{tpu_custom_call.1} parent=5 // pred_check_branch
        %124 = sbr.rel (%p121) target = $region12
      $region11: #{tpu_custom_call.1} parent=5 // pred_region
        %s125 = ssub.s32 %s12, 1
        // Predicated region
        $region13: #{tpu_custom_call.1} parent=11 // pred_check
          %p126 = pneg %p85
        $region14: #{tpu_custom_call.1} parent=11 // pred_check_branch
          %128 = sbr.rel (%p126) target = $region16
        $region15: #{tpu_custom_call.1} parent=11 // pred_region
          _
        $region16: #{tpu_custom_call.1} parent=11 // pred_fallthru
          _
      $region12: #{tpu_custom_call.1} parent=5 // pred_fallthru
        _
      %p129 = scmp.lt.s32.totalorder %s12, 2
      // Predicated region
      $region17: #{tpu_custom_call.1} parent=5 // pred_check
        %p130 = pneg %p129
      $region18: #{tpu_custom_call.1} parent=5 // pred_check_branch
        %132 = sbr.rel (%p130) target = $region20
      $region19: #{tpu_custom_call.1} parent=5 // pred_region
        // Predicated region
        $region21: #{tpu_custom_call.1} parent=19 // pred_check
          %p133 = pneg %p32
        $region22: #{tpu_custom_call.1} parent=19 // pred_check_branch
          %135 = sbr.rel (%p133) target = $region24
        $region23: #{tpu_custom_call.1} parent=19 // pred_region
          %p136 = scmp.lt.s32.totalorder %s12, 1
          %s137 = scalar_select %p136, %s12, 1
          %s138 = smul.addr %s137, 8
          %s139 = smul.addr %s138, 8
          %s140 = scalar_lea.vmem %s0, %s139
        $region24: #{tpu_custom_call.1} parent=19 // pred_fallthru
          _
        // Predicated region
        $region25: #{tpu_custom_call.1} parent=19 // pred_check
          %p141 = pneg %p58
        $region26: #{tpu_custom_call.1} parent=19 // pred_check_branch
          %143 = sbr.rel (%p141) target = $region28
        $region27: #{tpu_custom_call.1} parent=19 // pred_region
          %p144 = scmp.lt.s32.totalorder %s12, 1
          %s145 = scalar_select %p144, %s12, 1
          %s146 = smul.addr %s145, 2
          %s147 = smul.addr %s146, 2
          %s148 = scalar_lea.vmem %s1, %s147
        $region28: #{tpu_custom_call.1} parent=19 // pred_fallthru
          _
      $region20: #{tpu_custom_call.1} parent=5 // pred_fallthru
        _
      %p149 = scmp.le.s32.totalorder 1, %s12
      %p150 = scmp.lt.s32.totalorder %s12, 3
      %p151 = pnand %p149, %p150
      %p152 = pneg %p151
      // Predicated region
      $region29: #{tpu_custom_call.1} parent=5 // pred_check
        _
      $region30: #{tpu_custom_call.1} parent=5 // pred_check_branch
        %154 = sbr.rel (%p151) target = $region32
      $region31: #{tpu_custom_call.1} parent=5 // pred_region
        %s155 = ssub.s32 %s12, 1
        %p156 = scmp.lt.s32.totalorder %s17, 1
        %s157 = scalar_select %p156, %s17, 1
        %s158 = smul.addr %s157, 8
        %s159 = smul.addr %s158, 8
        %s160 = scalar_lea.vmem %s0, %s159
        %p161 = pneg %p38
        %p162 = pneg %p35
        %p163 = scmp.lt.s32.totalorder %s17, 1
        %s164 = scalar_select %p163, %s17, 1
        %s165 = smul.addr %s164, 2
        %s166 = smul.addr %s165, 2
        %s167 = scalar_lea.vmem %s1, %s166
        %p168 = pneg %p64
        %p169 = pneg %p61
        %p170 = pneg %p85
        %p171 = pneg %p82
        %p172 = pneg %p111
        %p173 = pneg %p108
        %s174 = sand.u32 %s98, 1
        %s175 = scalar_lea.sflag [#allocation3], %s174
        %s176 = sand.u32 %s98, 1
        %s177 = smul.addr %s176, 8
        %s178 = scalar_lea.vmem [#allocation2], %s177
        %p179 = scmp.lt.s32.totalorder %s17, 1
        %s180 = scalar_select %p179, %s17, 1
        %s181 = smul.addr %s180, 8
        %s182 = smul.addr %s181, 8
        %s183 = scalar_lea.vmem %s0, %s182
        %p184 = scmp.lt.s32.totalorder %s17, 1
        %s185 = scalar_select %p184, %s17, 1
        %s186 = smul.addr %s185, 2
        %s187 = smul.addr %s186, 2
        %s188 = scalar_lea.vmem %s1, %s187
        %v189 = vld [vmem:[%s188] sm:$0xf]
        %v190 = vmul.f32 %v189, 8.0
        %v191 = vld [vmem:[%s2] ss:$2 sm:$0x3]
        %v194 = vunpack.c.l.s4 857870592
        %v195 = vunpack.c.0.s8 %v194
        %v196 = vlaneseq
        %v197 = vshrl.u32 %v196, 7
        %v198 = vsub.s32 %v195, %v197
        %v199 = vrot.slane %v191, %v198
        %v201 = vadd.f32 %v190, %v199
        %s202 = scalar_lea.vmem %s2, 1
        %v203 = vld [vmem:[%s202] ss:$2 sm:$0x3]
        %v206 = vunpack.c.l.s4 857870592
        %v207 = vunpack.c.0.s8 %v206
        %v208 = vlaneseq
        %v209 = vshrl.u32 %v208, 7
        %v210 = vsub.s32 %v207, %v209
        %v211 = vrot.slane %v203, %v210
        %v213 = vadd.f32 %v190, %v211
        %v214 = vlaneseq
        %v215 = vshrl.u32 %v214, 7
        %v216 = vadd.s32 %v215, 8
        %v217 = vcvt.s32.f32 %v215
        %v218 = vcvt.s32.f32 %v216
        %v220 = vlaneseq
        %v221 = vshrl.u32 %v220, 7
        %v222 = vsub.s32 0, %v221
        %v223 = vrot.slane %v201, %v222
        %v224 = vlaneseq
        %v225 = vshrl.u32 %v224, 7
        %v226 = vsub.s32 2, %v225
        %v227 = vrot.slane %v201, %v226
        %v230 = vlaneseq
        %v231 = vshrl.u32 %v230, 7
        %v232 = vsub.s32 0, %v231
        %v233 = vrot.slane %v223, %v232
        %v234 = vlaneseq
        %v235 = vshrl.u32 %v234, 7
        %v236 = vsub.s32 0, %v235
        %v237 = vrot.slane %v227, %v236
        %v238 = vsub.f32 %v217, %v233
        %v239 = vsub.f32 %v217, %v237
        %v240 = vsub.f32 %v218, %v233
        %v241 = vsub.f32 %v218, %v237
        %v242 = vand.u32 2147483647, %v238
        %v243 = vand.u32 2147483647, %v239
        %v244 = vand.u32 2147483647, %v240
        %v245 = vand.u32 2147483647, %v241
        %v246 = vsub.f32 1.0, %v242
        %v247 = vsub.f32 1.0, %v243
        %v248 = vsub.f32 1.0, %v244
        %v249 = vsub.f32 1.0, %v245
        %v250 = vmax.f32 %v246, 0.0
        %v251 = vmax.f32 %v247, 0.0
        %v252 = vmax.f32 %v248, 0.0
        %v253 = vmax.f32 %v249, 0.0
        %v255 = vlaneseq
        %v256 = vshrl.u32 %v255, 7
        %v257 = vsub.s32 1, %v256
        %v258 = vrot.slane %v213, %v257
        %v259 = vlaneseq
        %v260 = vshrl.u32 %v259, 7
        %v261 = vsub.s32 3, %v260
        %v262 = vrot.slane %v213, %v261
        %v265 = vlaneseq
        %v266 = vshrl.u32 %v265, 7
        %v267 = vsub.s32 1, %v266
        %v268 = vrot.slane %v258, %v267
        %v269 = vlaneseq
        %v270 = vshrl.u32 %v269, 7
        %v271 = vsub.s32 1, %v270
        %v272 = vrot.slane %v262, %v271
        %v273 = vsub.f32 %v217, %v268
        %v274 = vsub.f32 %v217, %v272
        %v275 = vsub.f32 %v218, %v268
        %v276 = vsub.f32 %v218, %v272
        %v277 = vand.u32 2147483647, %v273
        %v278 = vand.u32 2147483647, %v274
        %v279 = vand.u32 2147483647, %v275
        %v280 = vand.u32 2147483647, %v276
        %v281 = vsub.f32 1.0, %v277
        %v282 = vsub.f32 1.0, %v278
        %v283 = vsub.f32 1.0, %v279
        %v284 = vsub.f32 1.0, %v280
        %v285 = vmax.f32 %v281, 0.0
        %v286 = vmax.f32 %v282, 0.0
        %v287 = vmax.f32 %v283, 0.0
        %v288 = vmax.f32 %v284, 0.0
        %v289 = vld [vmem:[%s183] sm:$0xff]
        %v290 = vld [vmem:[%s183 + $0x8] sm:$0xff]
        %v291 = vld [vmem:[%s183 + $0x10] sm:$0xff]
        %v292 = vld [vmem:[%s183 + $0x18] sm:$0xff]
        %v293 = vld [vmem:[%s183 + $0x20] sm:$0xff]
        %v294 = vld [vmem:[%s183 + $0x28] sm:$0xff]
        %v295 = vld [vmem:[%s183 + $0x30] sm:$0xff]
        %v296 = vld [vmem:[%s183 + $0x38] sm:$0xff]
        %vm297 = vcmask 130048
        %v299 = vsel %vm297, %v289, 0
        %v302 = vsel %vm297, %v290, 0
        %v305 = vsel %vm297, %v291, 0
        %v308 = vsel %vm297, %v292, 0
        %v311 = vsel %vm297, %v293, 0
        %v314 = vsel %vm297, %v294, 0
        %v317 = vsel %vm297, %v295, 0
        %v320 = vsel %vm297, %v296, 0
        %322 = vmatprep.subr.mxu0 %v251
        %323 = vmatpush1.msra.mxu0 %v250
        %324 = vmatprep.subr.mxu0 %v253
        %325 = vmatpush1.msra.mxu0 %v252
        %326 = vmatprep.subr.mxu0 0.0
        %327 = vmatpush1.msra.mxu0 0.0
        %328 = vmatprep.subr.mxu0 0.0
        %329 = vmatpush1.msra.mxu0 0.0
        %330 = vmatprep.subr.mxu0 0.0
        %331 = vmatpush1.msra.mxu0 0.0
        %332 = vmatprep.subr.mxu0 0.0
        %333 = vmatpush1.msra.mxu0 0.0
        %334 = vmatprep.subr.mxu0 0.0
        %335 = vmatpush1.msra.mxu0 0.0
        %336 = vmatprep.subr.mxu0 0.0
        %337 = vmatpush1.msra.mxu0 0.0
        %338 = vmatprep.subr.mxu0 0.0
        %339 = vmatpush1.msra.mxu0 0.0
        %340 = vmatprep.subr.mxu0 0.0
        %341 = vmatpush1.msra.mxu0 0.0
        %342 = vmatprep.subr.mxu0 0.0
        %343 = vmatpush1.msra.mxu0 0.0
        %344 = vmatprep.subr.mxu0 0.0
        %345 = vmatpush1.msra.mxu0 0.0
        %346 = vmatprep.subr.mxu0 0.0
        %347 = vmatpush1.msra.mxu0 0.0
        %348 = vmatprep.subr.mxu0 0.0
        %349 = vmatpush1.msra.mxu0 0.0
        %350 = vmatprep.subr.mxu0 0.0
        %351 = vmatpush1.msra.mxu0 0.0
        %352 = vmatprep.subr.mxu0 0.0
        %353 = vmatpush1.msra.mxu0 0.0
        %354 = vmatprep.subr.mxu0 0.0
        %355 = vmatpush1.msra.mxu0 0.0
        %356 = vmatprep.subr.mxu0 0.0
        %357 = vmatpush1.msra.mxu0 0.0
        %358 = vmatprep.subr.mxu0 0.0
        %359 = vmatpush1.msra.mxu0 0.0
        %360 = vmatprep.subr.mxu0 0.0
        %361 = vmatpush1.msra.mxu0 0.0
        %362 = vmatprep.subr.mxu0 0.0
        %363 = vmatpush1.msra.mxu0 0.0
        %364 = vmatprep.subr.mxu0 0.0
        %365 = vmatpush1.msra.mxu0 0.0
        %366 = vmatprep.subr.mxu0 0.0
        %367 = vmatpush1.msra.mxu0 0.0
        %368 = vmatprep.subr.mxu0 0.0
        %369 = vmatpush1.msra.mxu0 0.0
        %370 = vmatprep.subr.mxu0 0.0
        %371 = vmatpush1.msra.mxu0 0.0
        %372 = vmatprep.subr.mxu0 0.0
        %373 = vmatpush1.msra.mxu0 0.0
        %374 = vmatprep.subr.mxu0 0.0
        %375 = vmatpush1.msra.mxu0 0.0
        %376 = vmatprep.subr.mxu0 0.0
        %377 = vmatpush1.msra.mxu0 0.0
        %378 = vmatprep.subr.mxu0 0.0
        %379 = vmatpush1.msra.mxu0 0.0
        %380 = vmatprep.subr.mxu0 0.0
        %381 = vmatpush1.msra.mxu0 0.0
        %382 = vmatprep.subr.mxu0 0.0
        %383 = vmatpush1.msra.mxu0 0.0
        %384 = vmatprep.subr.mxu0 0.0
        %385 = vmatpush1.msra.mxu0 0.0
        %386 = vmatprep.mubr.f32.mxu0 0.0
        %387 = vmatmul.mubr.f32.gmra.mrb[0].mxu0 %v299
        %v388 = vpop.f32.mrb[0].mxu0
        %v389 = vadd.f32 0.0, %v388
        %v390 = vpop.f32.mrb[0].mxu0
        %v391 = vadd.f32 0.0, %v390
        %392 = vmatprep.mubr.f32.mxu0 0.0
        %393 = vmatmul.mubr.f32.gmra.mrb[0].mxu0 %v302
        %v394 = vpop.f32.mrb[0].mxu0
        %v395 = vadd.f32 0.0, %v394
        %v396 = vpop.f32.mrb[0].mxu0
        %v397 = vadd.f32 0.0, %v396
        %398 = vmatprep.mubr.f32.mxu0 0.0
        %399 = vmatmul.mubr.f32.gmra.mrb[0].mxu0 %v305
        %v400 = vpop.f32.mrb[0].mxu0
        %v401 = vadd.f32 0.0, %v400
        %v402 = vpop.f32.mrb[0].mxu0
        %v403 = vadd.f32 0.0, %v402
        %404 = vmatprep.mubr.f32.mxu0 0.0
        %405 = vmatmul.mubr.f32.gmra.mrb[0].mxu0 %v308
        %v406 = vpop.f32.mrb[0].mxu0
        %v407 = vadd.f32 0.0, %v406
        %v408 = vpop.f32.mrb[0].mxu0
        %v409 = vadd.f32 0.0, %v408
        %410 = vmatprep.mubr.f32.mxu0 0.0
        %411 = vmatmul.mubr.f32.gmra.mrb[0].mxu0 %v311
        %v412 = vpop.f32.mrb[0].mxu0
        %v413 = vadd.f32 0.0, %v412
        %v414 = vpop.f32.mrb[0].mxu0
        %v415 = vadd.f32 0.0, %v414
        %416 = vmatprep.mubr.f32.mxu0 0.0
        %417 = vmatmul.mubr.f32.gmra.mrb[0].mxu0 %v314
        %v418 = vpop.f32.mrb[0].mxu0
        %v419 = vadd.f32 0.0, %v418
        %v420 = vpop.f32.mrb[0].mxu0
        %v421 = vadd.f32 0.0, %v420
        %422 = vmatprep.mubr.f32.mxu0 0.0
        %423 = vmatmul.mubr.f32.gmra.mrb[0].mxu0 %v317
        %v424 = vpop.f32.mrb[0].mxu0
        %v425 = vadd.f32 0.0, %v424
        %v426 = vpop.f32.mrb[0].mxu0
        %v427 = vadd.f32 0.0, %v426
        %428 = vmatprep.mubr.f32.mxu0 0.0
        %429 = vmatmul.mubr.f32.gmra.mrb[0].mxu0 %v320
        %v430 = vpop.f32.mrb[0].mxu0
        %v431 = vadd.f32 0.0, %v430
        %v432 = vpop.f32.mrb[0].mxu0
        %v433 = vadd.f32 0.0, %v432
        %434 = vdwg.mxu0
        %v435 = vmul.f32 %v389, %v285
        %v436 = vmul.f32 %v391, %v286
        %v437 = vmul.f32 %v395, %v287
        %v438 = vmul.f32 %v397, %v288
        %v439 = vmul.f32 %v401, %v285
        %v440 = vmul.f32 %v403, %v286
        %v441 = vmul.f32 %v407, %v287
        %v442 = vmul.f32 %v409, %v288
        %v443 = vmul.f32 %v413, %v285
        %v444 = vmul.f32 %v415, %v286
        %v445 = vmul.f32 %v419, %v287
        %v446 = vmul.f32 %v421, %v288
        %v447 = vmul.f32 %v425, %v285
        %v448 = vmul.f32 %v427, %v286
        %v449 = vmul.f32 %v431, %v287
        %v450 = vmul.f32 %v433, %v288
        %v451 = vadd.f32 %v435, %v437
        %v452 = vrot.slane %v451, 4
        %v453 = vadd.f32 %v451, %v452
        %v454 = vrot.slane %v453, 2
        %v455 = vadd.f32 %v453, %v454
        %v456 = vrot.slane %v455, 1
        %v457 = vadd.f32 %v455, %v456
        %v458 = vadd.f32 %v436, %v438
        %v459 = vrot.slane %v458, 4
        %v460 = vadd.f32 %v458, %v459
        %v461 = vrot.slane %v460, 2
        %v462 = vadd.f32 %v460, %v461
        %v463 = vrot.slane %v462, 1
        %v464 = vadd.f32 %v462, %v463
        %v465 = vadd.f32 %v439, %v441
        %v466 = vrot.slane %v465, 4
        %v467 = vadd.f32 %v465, %v466
        %v468 = vrot.slane %v467, 2
        %v469 = vadd.f32 %v467, %v468
        %v470 = vrot.slane %v469, 1
        %v471 = vadd.f32 %v469, %v470
        %v472 = vadd.f32 %v440, %v442
        %v473 = vrot.slane %v472, 4
        %v474 = vadd.f32 %v472, %v473
        %v475 = vrot.slane %v474, 2
        %v476 = vadd.f32 %v474, %v475
        %v477 = vrot.slane %v476, 1
        %v478 = vadd.f32 %v476, %v477
        %v479 = vadd.f32 %v443, %v445
        %v480 = vrot.slane %v479, 4
        %v481 = vadd.f32 %v479, %v480
        %v482 = vrot.slane %v481, 2
        %v483 = vadd.f32 %v481, %v482
        %v484 = vrot.slane %v483, 1
        %v485 = vadd.f32 %v483, %v484
        %v486 = vadd.f32 %v444, %v446
        %v487 = vrot.slane %v486, 4
        %v488 = vadd.f32 %v486, %v487
        %v489 = vrot.slane %v488, 2
        %v490 = vadd.f32 %v488, %v489
        %v491 = vrot.slane %v490, 1
        %v492 = vadd.f32 %v490, %v491
        %v493 = vadd.f32 %v447, %v449
        %v494 = vrot.slane %v493, 4
        %v495 = vadd.f32 %v493, %v494
        %v496 = vrot.slane %v495, 2
        %v497 = vadd.f32 %v495, %v496
        %v498 = vrot.slane %v497, 1
        %v499 = vadd.f32 %v497, %v498
        %v500 = vadd.f32 %v448, %v450
        %v501 = vrot.slane %v500, 4
        %v502 = vadd.f32 %v500, %v501
        %v503 = vrot.slane %v502, 2
        %v504 = vadd.f32 %v502, %v503
        %v505 = vrot.slane %v504, 1
        %v506 = vadd.f32 %v504, %v505
        %v515 = vcombine.low %v457, %v464
        %v516 = vcombine.low %v471, %v478
        %v517 = vcombine.low %v485, %v492
        %v518 = vcombine.low %v499, %v506
        %v519 = vrot.slane %v516, 7
        %vm520 = vcmask 1041409
        %v521 = vsel %vm520, %v519, %v515
        %vm522 = vcmask 1045509
        %v523 = vsel %vm522, %v519, %v521
        %v524 = vrot.slane %v517, 6
        %vm525 = vcmask 1042434
        %v526 = vsel %vm525, %v524, %v523
        %vm527 = vcmask 1046534
        %v528 = vsel %vm527, %v524, %v526
        %v529 = vrot.slane %v518, 5
        %vm530 = vcmask 1043459
        %v531 = vsel %vm530, %v529, %v528
        %vm532 = vcmask 1047559
        %v533 = vsel %vm532, %v529, %v531
        %535 = vst [vmem:[%s178] sm:$0xff] %v533
        %s536 = sand.u32 %s98, 1
        %s537 = scalar_lea.sflag [#allocation3], %s536
        %s538 = sand.u32 %s98, 1
        %s539 = smul.addr %s538, 8
        %s540 = scalar_lea.vmem [#allocation2], %s539
        // Predicated region
        $region33: #{tpu_custom_call.1} parent=31 // pred_check
          %p541 = pneg %p108
        $region34: #{tpu_custom_call.1} parent=31 // pred_check_branch
          %543 = sbr.rel (%p541) target = $region36
        $region35: #{tpu_custom_call.1} parent=31 // pred_region
          %s545 = ssub.s32 128, 128
          %546 = vsyncadd %s537, %s545
          %s547 = smul.addr %s17, 2
          %s548 = smul.addr %s547, 64
          %s549 = scalar_lea.hbm %s3, %s548
          %s551 = sshll.u32 %s540, 4
          %s552 = int_to_ptr.vmem [resolvable:$true] %s551
          %554 = dma.vmem_to_hbm [thread:$0]  %s552, 128, %s549, %s537
        $region36: #{tpu_custom_call.1} parent=31 // pred_fallthru
          _
      $region32: #{tpu_custom_call.1} parent=5 // pred_fallthru
        _
      %p555 = scmp.le.s32.totalorder 2, %s12
      // Predicated region
      $region37: #{tpu_custom_call.1} parent=5 // pred_check
        %p556 = pneg %p555
      $region38: #{tpu_custom_call.1} parent=5 // pred_check_branch
        %558 = sbr.rel (%p556) target = $region40
      $region39: #{tpu_custom_call.1} parent=5 // pred_region
        %s559 = ssub.s32 %s12, 2
        // Predicated region
        $region41: #{tpu_custom_call.1} parent=39 // pred_check
          %p560 = pneg %p114
        $region42: #{tpu_custom_call.1} parent=39 // pred_check_branch
          %562 = sbr.rel (%p560) target = $region44
        $region43: #{tpu_custom_call.1} parent=39 // pred_region
          %s563 = sand.u32 %s99, 1
          %s564 = scalar_lea.sflag [#allocation3], %s563
          %s565 = sand.u32 %s99, 1
          %s566 = smul.addr %s565, 8
          %s567 = scalar_lea.vmem [#allocation2], %s566
          %568 = dma.done %s564, 128
        $region44: #{tpu_custom_call.1} parent=39 // pred_fallthru
          _
      $region40: #{tpu_custom_call.1} parent=5 // pred_fallthru
        _
    $region6: #{tpu_custom_call.1} parent=1 // loop_footer
      %s16 = sadd.s32 1, %s12
    $region7: #{tpu_custom_call.1} parent=1 // loop_footer_branch
      %11 = sbr.rel target = $region3
    $region8: #{tpu_custom_call.1} parent=1 // loop_exit
      _
    %569 = vsyncpa [#allocation3], 1
    %s570 = scalar_lea.sflag [#allocation3], 1
    %571 = vsyncpa %s570, 1

</llo_original>
